<compile_context>
chip_gen: v7x
topology: tpu7x:2x2x1
jax: 0.10.0
libtpu: 0.0.40
codegen_flags: <defaults>
</compile_context>

<pallas_src>
import functools
import math

import jax
import jax.numpy as jnp
from jax.experimental import pallas as pl
from jax.experimental.pallas import tpu as pltpu

_C1 = math.sqrt(2.0 / math.pi)             # sqrt(2/pi)
_C2 = math.sqrt(2.0 / math.pi) * 0.044715  # sqrt(2/pi) * 0.044715

_MIB = 1024 * 1024
# Per-generation target tile bytes (per array, per buffer). Chosen so that
# 2 buffers x (in + out) x tile stays inside the scoped-VMEM default of the
# generation (v5e: 16 MiB, v6e: 32 MiB, v7x: 32 MiB) without any override.
_TILE_BYTES = {
    "v7x": 6 * _MIB,
    "v6e": 6 * _MIB,
    "v5p": 4 * _MIB,
    "v5e": 2 * _MIB,
    "unknown": 2 * _MIB,
}


def _tpu_generation():
    """Best-effort TPU generation detection (never raises)."""
    try:
        kind = jax.devices()[0].device_kind.lower()
    except Exception:  # pragma: no cover - defensive
        return "unknown"
    if "v7" in kind or "7x" in kind:
        return "v7x"
    if "v6" in kind:
        return "v6e"
    if "v5p" in kind:
        return "v5p"
    if "v5" in kind:
        return "v5e"
    return "unknown"


def _gelu_kernel(x_ref, o_ref, *, compute_dtype):
    x = x_ref[...].astype(compute_dtype)
    # GELU(x) = 0.5 * x * (1 + tanh(sqrt(2/pi) * (x + 0.044715 * x^3)))
    # factored: inner = x * (c1 + c2 * x * x)   (fewer VALU multiplies).
    # Python-float constants are weakly typed, so nothing promotes in bf16 mode.
    inner = x * (_C1 + _C2 * (x * x))
    y = x * (0.5 + 0.5 * jnp.tanh(inner))
    o_ref[...] = y.astype(o_ref.dtype)


def _pick_lane_width(n_padded):
    """Largest divisor of n_padded that is a multiple of 128 and <= 8192."""
    m = n_padded // 128  # n_padded is always a multiple of 128 here
    for d in range(min(64, m), 0, -1):
        if m % d == 0:
            return 128 * d
    return 128


def _pick_block_rows(rows, cols, itemsize, target_bytes, min_steps):
    # Sublane granularity depends on dtype packing: f32 -> 8, bf16 -> 16, int8 -> 32.
    sub = {4: 8, 2: 16, 1: 32}.get(itemsize, 8)
    if rows <= sub:
        return rows
    tr = max(1, target_bytes // max(1, cols * itemsize))
    if min_steps > 1:
        # Cap the tile so the grid has at least min_steps steps (megacore
        # sharding across v7x's two TensorCores needs >1 grid step).
        tr = min(tr, pl.cdiv(rows, min_steps))
    if tr >= rows:
        return rows
    return max(sub, (tr // sub) * sub)


def gelu(x, *, target_block_bytes=None):
    """tanh-approx GELU, elementwise, via a Pallas TPU kernel. Accepts any shape."""
    if x.size == 0:
        return x
    orig_shape = x.shape
    n = x.size

    gen = _tpu_generation()
    if target_block_bytes is None:
        target_block_bytes = _TILE_BYTES.get(gen, 2 * _MIB)
    min_steps = 8 if gen == "v7x" else 1

    # bf16 compute path only where the bf16 VPU/EUP makes it worthwhile (v7x);
    # everywhere else compute in f32 for accuracy (v5e has no bf16 VPU/EUP).
    compute_dtype = jnp.float32
    if gen == "v7x" and x.dtype == jnp.bfloat16:
        compute_dtype = jnp.bfloat16

    # Lane-dense repack: pad the flat vector to a multiple of 128 if needed so
    # the last dim is always a large multiple of 128 (unmasked vector stores).
    n_pad = ((n + 127) // 128) * 128
    flat = x.reshape(-1)
    if n_pad != n:
        flat = jnp.pad(flat, (0, n_pad - n))
    cols = _pick_lane_width(n_pad)
    rows = n_pad // cols
    x2d = flat.reshape(rows, cols)

    itemsize = jnp.dtype(x.dtype).itemsize
    tr = _pick_block_rows(rows, cols, itemsize, target_block_bytes, min_steps)
    grid = (pl.cdiv(rows, tr),)

    out = pl.pallas_call(
        functools.partial(_gelu_kernel, compute_dtype=compute_dtype),
        out_shape=jax.ShapeDtypeStruct((rows, cols), x.dtype),
        grid=grid,
        in_specs=[pl.BlockSpec((tr, cols), lambda i: (i, 0))],
        out_specs=pl.BlockSpec((tr, cols), lambda i: (i, 0)),
        compiler_params=pltpu.CompilerParams(
            dimension_semantics=("parallel",),
        ),
        cost_estimate=pl.CostEstimate(
            flops=8 * n_pad,
            transcendentals=n_pad,
            bytes_accessed=2 * n_pad * itemsize,
        ),
    )(x2d)

    if n_pad != n:
        out = out.reshape(-1)[:n]
    return out.reshape(orig_shape)


def gelu_ref(x):
    xf = x.astype(jnp.float32)
    c = jnp.float32(math.sqrt(2.0 / math.pi))
    y = 0.5 * xf * (1.0 + jnp.tanh(c * (xf + 0.044715 * xf ** 3)))
    return y.astype(x.dtype)


if __name__ == "__main__":
    key = jax.random.PRNGKey(0)

    # Small transformer-ish shape: batch=2, seq=8, hidden=32 (f32).
    x = jax.random.normal(key, (2, 8, 32), dtype=jnp.float32)
    y = gelu(x)
    jax.block_until_ready(y)
    y_ref = gelu_ref(x)
    assert y.shape == x.shape and y.dtype == x.dtype
    assert jnp.allclose(y, y_ref, atol=1e-5, rtol=1e-5), "f32 mismatch vs reference"

    # Awkward element count (exercises the pad-to-128 lane-dense path).
    k1, k2 = jax.random.split(key)
    x_odd = jax.random.normal(k1, (3, 7, 9), dtype=jnp.float32)
    y_odd = gelu(x_odd)
    jax.block_until_ready(y_odd)
    assert y_odd.shape == x_odd.shape
    assert jnp.allclose(y_odd, gelu_ref(x_odd), atol=1e-5, rtol=1e-5), "ragged mismatch"

    # bf16 input (bf16 compute path on v7x; loose tolerance covers a few ulps).
    x_bf = jax.random.normal(k2, (2, 8, 32), dtype=jnp.bfloat16)
    y_bf = gelu(x_bf)
    jax.block_until_ready(y_bf)
    assert y_bf.dtype == jnp.bfloat16
    assert jnp.allclose(
        y_bf.astype(jnp.float32), gelu_ref(x_bf).astype(jnp.float32),
        atol=5e-2, rtol=5e-2,
    ), "bf16 mismatch vs reference"

    print("KERNEL_OK")
</pallas_src>

<mosaic_0001>
module attributes {stable_mosaic.version = 11 : i64} {
  func.func @_gelu_kernel(%arg0: i32, %arg1: memref<1x512xf32, #tpu.memory_space<vmem>>, %arg2: memref<1x512xf32, #tpu.memory_space<vmem>>) attributes {dimension_semantics = [#tpu.dimension_semantics<parallel>], iteration_bounds = array<i64: 1>, scalar_prefetch = 0 : i64, scratch_operands = 0 : i64, tpu.core_type = #tpu.core_type<tc>, window_params = [{transform_indices = @transform_0, window_bounds = array<i64: 1, 512>}, {transform_indices = @transform_1, window_bounds = array<i64: 1, 512>}]} {
    %c0 = arith.constant 0 : index
    %c0_0 = arith.constant 0 : index
    %0 = vector.load %arg1[%c0, %c0_0] : memref<1x512xf32, #tpu.memory_space<vmem>>, vector<1x512xf32>
    %1 = arith.mulf %0, %0 : vector<1x512xf32>
    %cst = arith.constant 0.0356774069 : f32
    %2 = vector.broadcast %cst : f32 to vector<1x512xf32>
    %3 = arith.mulf %2, %1 : vector<1x512xf32>
    %cst_1 = arith.constant 0.797884583 : f32
    %4 = vector.broadcast %cst_1 : f32 to vector<1x512xf32>
    %5 = arith.addf %4, %3 : vector<1x512xf32>
    %6 = arith.mulf %0, %5 : vector<1x512xf32>
    %7 = math.tanh %6 : vector<1x512xf32>
    %cst_2 = arith.constant 5.000000e-01 : f32
    %8 = vector.broadcast %cst_2 : f32 to vector<1x512xf32>
    %9 = arith.mulf %8, %7 : vector<1x512xf32>
    %cst_3 = arith.constant 5.000000e-01 : f32
    %10 = vector.broadcast %cst_3 : f32 to vector<1x512xf32>
    %11 = arith.addf %10, %9 : vector<1x512xf32>
    %12 = arith.mulf %0, %11 : vector<1x512xf32>
    %c0_4 = arith.constant 0 : index
    %c0_5 = arith.constant 0 : index
    %13 = vector.load %arg2[%c0_4, %c0_5] : memref<1x512xf32, #tpu.memory_space<vmem>>, vector<1x512xf32>
    tpu.vector_store %arg2[%c0_4, %c0_5], %12 {strides = array<i32>} : memref<1x512xf32, #tpu.memory_space<vmem>>, vector<1x512xf32>,
    return
  }
  func.func @transform_0(%arg0: i32) -> (i32, i32) {
    %c0_i32 = arith.constant 0 : i32
    %c0_i32_0 = arith.constant 0 : i32
    return %arg0, %c0_i32 : i32, i32
  }
  func.func @transform_1(%arg0: i32) -> (i32, i32) {
    %c0_i32 = arith.constant 0 : i32
    %c0_i32_0 = arith.constant 0 : i32
    return %arg0, %c0_i32 : i32, i32
  }
}

</mosaic_0001>

<llo_original>
// kernel: tpu_custom_call.1
$region0: #{tpu_custom_call.1}
  #allocation0 [shape = 'u32[]', space=smem, size = 0x4, offset = 0x4, fixed_abs, tag = 'smem constant byte address 0x4 - core index']
  #allocation1 [shape = 'u32[144,128]{1,0:T(1,128)}', space=vmem, size = 0x12000, scoped, tag = 'internal scratch']
  %s0 = inlined_call_operand.hbm [shape: f32[1,512], index: 0, kind: input, shape index: {}]
  %s1 = inlined_call_operand.hbm [shape: f32[1,512], index: 1, kind: output, shape index: {}]
  %s2 = sld [smem:[#allocation0]]
  $region18: #{tpu_custom_call.1} parent=0
    _
  %s4 = ssub.s32 1, %s2
  %s5 = scalar_select 0, %s4, %s2
  $region1: #{tpu_custom_call.1} parent=0
    #allocation2 [shape = 'u8[2048]{0}', space=vmem, size = 0x800, scoped, tag = 'input window, operand 0, single buffered']
    #allocation3 [shape = 's32[1]{0}', space=sflag, size = 0x4, scoped, tag = 'scoped memory for tpu_custom_call.1']
    #allocation4 [shape = 's32[1]{0}', space=sflag, size = 0x4, scoped, tag = 'scoped memory for tpu_custom_call.1']
    #allocation5 [shape = 'u8[2048]{0}', space=vmem, size = 0x800, scoped, tag = 'output window, operand 0, single buffered']
    %6 = vsyncpa [#allocation3], 0
    %7 = vsyncpa [#allocation4], 0
    // Predicated region
    $region2: #{tpu_custom_call.1} parent=1 // pred_check
      _
    $region3: #{tpu_custom_call.1} parent=1 // pred_check_branch
      %9 = sbr.rel (0) target = $region5
    $region4: #{tpu_custom_call.1} parent=1 // pred_region
      %s11 = ssub.s32 64, 64
      %12 = vsyncadd [#allocation3], %s11
      %s14 = sshll.u32 [#allocation2], 4
      %s15 = int_to_ptr.vmem [resolvable:$true] %s14
      %17 = dma.hbm_to_vmem [thread:$0]  %s0, 64, %s15, [#allocation3]
    $region5: #{tpu_custom_call.1} parent=1 // pred_fallthru
      _
    // Predicated region
    $region6: #{tpu_custom_call.1} parent=1 // pred_check
      _
    $region7: #{tpu_custom_call.1} parent=1 // pred_check_branch
      %19 = sbr.rel (0) target = $region9
    $region8: #{tpu_custom_call.1} parent=1 // pred_region
      %20 = dma.done [#allocation3], 64
    $region9: #{tpu_custom_call.1} parent=1 // pred_fallthru
      _
    %v21 = vld [vmem:[#allocation2] sm:$0xf]
    %v22 = vmul.f32 %v21, %v21
    %v23 = vmul.f32 %v22, 0.035677407
    %v24 = vadd.f32 %v23, 0.7978846
    %v25 = vmul.f32 %v21, %v24
    %v26 = vtanh.pop %v25
    %v27 = vmul.f32 %v26, 0.5
    %v28 = vadd.f32 %v27, 0.5
    %v29 = vmul.f32 %v21, %v28
    %v30 = vlaneseq
    %vm31 = vcmp.ge.s32.totalorder %v30, 0
    %vm32 = vcmp.lt.s32.totalorder %v30, 512
    %vm33 = vmand %vm31, %vm32
    %34 = vst.msk [vmem:[#allocation5] sm:$0xf] %vm33, %v29
    // Predicated region
    $region10: #{tpu_custom_call.1} parent=1 // pred_check
      _
    $region11: #{tpu_custom_call.1} parent=1 // pred_check_branch
      %36 = sbr.rel (0) target = $region13
    $region12: #{tpu_custom_call.1} parent=1 // pred_region
      %s38 = ssub.s32 64, 64
      %39 = vsyncadd [#allocation4], %s38
      %s41 = sshll.u32 [#allocation5], 4
      %s42 = int_to_ptr.vmem [resolvable:$true] %s41
      %44 = dma.vmem_to_hbm [thread:$0]  %s42, 64, %s1, [#allocation4]
    $region13: #{tpu_custom_call.1} parent=1 // pred_fallthru
      _
    // Predicated region
    $region14: #{tpu_custom_call.1} parent=1 // pred_check
      _
    $region15: #{tpu_custom_call.1} parent=1 // pred_check_branch
      %46 = sbr.rel (0) target = $region17
    $region16: #{tpu_custom_call.1} parent=1 // pred_region
      %47 = dma.done [#allocation4], 64
    $region17: #{tpu_custom_call.1} parent=1 // pred_fallthru
      _
    %48 = vsyncpa [#allocation3], 1
    %49 = vsyncpa [#allocation4], 1

</llo_original>
